<compile_context>
chip_gen: v6e
topology: v6e:2x2x1
jax: 0.10.0
libtpu: 0.0.40
codegen_flags: <defaults>
</compile_context>

<pallas_src>
import jax
import jax.numpy as jnp
from jax.experimental import pallas as pl
from jax.experimental.pallas import tpu as pltpu


def _unembed_kernel(x_ref, o_ref):
    # x_ref: (TB, TN, C) VMEM tile  ->  o_ref: (TB, C, TN) VMEM tile.
    # Per-batch tokens<->channels transpose on-chip (XLU); output lane dim TN
    # is a multiple of 128 -> unmasked, lane-dense stores on every generation.
    # TODO(synk): sweep pltpu.einshape('bnc->bcn', ...) vs swapaxes and confirm
    # in the Mosaic bundle there is no extra relayout copy when C < 128.
    o_ref[...] = jnp.swapaxes(x_ref[...], 1, 2)


def _choose_tiles(B, N_pad, C, itemsize, *, min_steps=8, budget=8 << 20):
    """Pick (TB, TN) for grid=(B // TB, N_pad // TN).

    Mem-bound layout pass -> tiling policy is everything:
      * VMEM working set counts layout padding: input (TN, C) blocks pad C up
        to a 128-lane multiple; output (C, TN) blocks pad C up to an 8-sublane
        multiple.  Keep the double-buffered in+out set <= `budget`.
      * Depth-aware TN: shrink TN (multiples of 128 dividing N_pad, floor 256)
        until the grid has >= `min_steps` steps so the pipeline has something
        to overlap (measured: 512-wide tiles ~85% of HBM roofline, 256 ~63%).
      * Grow TB (divisor of B) while the per-step HBM transfer is tiny
        (< ~1 MiB) to amortize the ~0.35us per-step overhead, but never drop
        an already-sufficient pipeline depth.
    """
    lanes_in = -(-C // 128) * 128          # input block: C is the lane dim
    sub_out = -(-C // 8) * 8               # output block: C is the sublane dim
    per_row = (lanes_in + sub_out) * itemsize

    def wset(tb, tn):                      # double-buffered in+out VMEM bytes
        return 2 * tb * tn * per_row

    # Candidate TN: multiples of 128 dividing N_pad, largest first, cap 2048.
    cands = [t for t in range(128, min(N_pad, 2048) + 1, 128) if N_pad % t == 0]
    cands.sort(reverse=True)
    floor_tn = 256 if N_pad >= 256 else cands[-1]

    tn = cands[-1]
    for t in cands:
        if wset(1, t) > budget:
            continue
        tn = t
        if B * (N_pad // t) >= min_steps or t <= floor_tn:
            break

    tb = 1
    for cand in range(2, B + 1):
        if B % cand:
            continue
        if 2 * tb * tn * C * itemsize >= (1 << 20):   # per-step HBM transfer
            break                                      # already big enough
        if wset(cand, tn) > budget:
            break
        cur_steps = (B // tb) * (N_pad // tn)
        new_steps = (B // cand) * (N_pad // tn)
        if new_steps < min_steps and cur_steps >= min_steps:
            break                                      # keep pipeline depth
        tb = cand

    return tb, tn, wset(tb, tn)


def patch_unembed(x, H, W):
    """x: (B, N, C) with N == H*W  ->  (B, C, H, W) (PyTorch NCHW)."""
    B, N, C = x.shape
    assert N == H * W, "N must equal H*W"
    itemsize = jnp.dtype(x.dtype).itemsize

    # Lane-align N so every output store is a full-width (multiple-of-128) vst
    # and no whole-(N, C) slab fallback can blow VMEM on v7x.  Pad/slice is a
    # wrapper-side fallback only; it is a no-op when N is already aligned.
    N_pad = -(-N // 128) * 128
    x_p = x if N_pad == N else jnp.pad(x, ((0, 0), (0, N_pad - N), (0, 0)))

    tb, tn, wset_bytes = _choose_tiles(B, N_pad, C, itemsize)
    grid = (B // tb, N_pad // tn)

    # Scoped-VMEM limit: working set plus headroom, kept under the 32 MiB
    # scoped default (safe on v5e/v6e 128 MiB physical and v7x 64 MiB).
    vmem_limit = int(min(32 << 20, max(16 << 20, 4 * wset_bytes)))

    # TODO(synk): the highest-value optimization is to remove this pass
    # entirely by fusing the (B, C, N) layout into the producer/consumer
    # kernel's out_spec; a standalone transpose is a full HBM read + write.
    out_bcn = pl.pallas_call(
        _unembed_kernel,
        out_shape=jax.ShapeDtypeStruct((B, C, N_pad), x.dtype),
        grid_spec=pltpu.PrefetchScalarGridSpec(
            num_scalar_prefetch=0,
            grid=grid,
            in_specs=[
                # (TB, TN, C): last dim == full C, 2nd-last a multiple of 128.
                pl.BlockSpec((tb, tn, C), lambda b, i: (b, i, 0)),
            ],
            # (TB, C, TN): lane dim is a multiple of 128 -> unmasked stores.
            # TODO(synk): sweep pipeline_mode=pl.Buffered(3) on in/out specs
            # once grid depth > 2 if the read/write DMAs are still exposed.
            out_specs=pl.BlockSpec((tb, C, tn), lambda b, i: (b, 0, i)),
        ),
        compiler_params=pltpu.CompilerParams(
            # Both axes independent -> megacore sharding on v7x.
            dimension_semantics=("parallel", "parallel"),
            vmem_limit_bytes=vmem_limit,
        ),
        cost_estimate=pl.CostEstimate(
            flops=0,
            transcendentals=0,
            bytes_accessed=2 * B * N_pad * C * itemsize,
        ),
    )(x_p)

    if N_pad != N:
        out_bcn = out_bcn[:, :, :N]
    # Trailing-dim split (B, C, N) -> (B, C, H, W): free reshape.
    return out_bcn.reshape(B, C, H, W)


class PatchUnEmbed:
    """Patch embedding -> image. Mirrors the PyTorch module (no parameters)."""

    def __init__(self, img_size=128, patch_size=4, embed_dim=96):
        self.img_size = img_size
        self.patch_size = patch_size
        self.H, self.W = img_size // patch_size, img_size // patch_size
        self.embed_dim = embed_dim
        # Module has no learnable parameters; nothing to initialize.

    def __call__(self, x, H, W):
        return patch_unembed(x, H, W)


if __name__ == "__main__":
    key = jax.random.PRNGKey(0)

    # Main check: B=2, H=W=16 -> N=256 (lane-aligned path), C=32.
    B, H, W, C = 2, 16, 16, 32
    N = H * W
    x = jax.random.normal(key, (B, N, C), dtype=jnp.float32)

    module = PatchUnEmbed(img_size=64, patch_size=4, embed_dim=C)
    out = jax.block_until_ready(module(x, H, W))
    ref = jnp.swapaxes(x, 1, 2).reshape(B, C, H, W)
    assert out.shape == (B, C, H, W), out.shape
    assert out.dtype == x.dtype
    assert jnp.array_equal(out, ref), "mismatch vs reference (aligned path)"

    # Fallback check: N = 10*10 = 100 (not a multiple of 128) exercises the
    # wrapper pad/slice path so the kernel's stores stay lane-dense.
    B2, H2, W2, C2 = 2, 10, 10, 32
    x2 = jax.random.normal(jax.random.PRNGKey(0), (B2, H2 * W2, C2),
                           dtype=jnp.float32)
    out2 = jax.block_until_ready(patch_unembed(x2, H2, W2))
    ref2 = jnp.swapaxes(x2, 1, 2).reshape(B2, C2, H2, W2)
    assert jnp.array_equal(out2, ref2), "mismatch vs reference (padded path)"

    print("KERNEL_OK")
</pallas_src>

<mosaic_0001>
module attributes {stable_mosaic.version = 11 : i64} {
  func.func @_unembed_kernel(%arg0: i32, %arg1: i32, %arg2: memref<2x256x32xf32, #tpu.memory_space<vmem>>, %arg3: memref<2x32x256xf32, #tpu.memory_space<vmem>>) attributes {dimension_semantics = [#tpu.dimension_semantics<parallel>, #tpu.dimension_semantics<parallel>], iteration_bounds = array<i64: 1, 1>, scalar_prefetch = 0 : i64, scratch_operands = 0 : i64, tpu.core_type = #tpu.core_type<tc>, window_params = [{transform_indices = @transform_0, window_bounds = array<i64: 2, 256, 32>}, {transform_indices = @transform_1, window_bounds = array<i64: 2, 32, 256>}]} {
    %c0 = arith.constant 0 : index
    %c0_0 = arith.constant 0 : index
    %c0_1 = arith.constant 0 : index
    %0 = vector.load %arg2[%c0, %c0_0, %c0_1] : memref<2x256x32xf32, #tpu.memory_space<vmem>>, vector<2x256x32xf32>
    %1 = tpu.transpose %0, [0, 2, 1] : vector<2x256x32xf32> -> vector<2x32x256xf32>
    %c0_2 = arith.constant 0 : index
    %c0_3 = arith.constant 0 : index
    %c0_4 = arith.constant 0 : index
    %2 = vector.load %arg3[%c0_2, %c0_3, %c0_4] : memref<2x32x256xf32, #tpu.memory_space<vmem>>, vector<2x32x256xf32>
    tpu.vector_store %arg3[%c0_2, %c0_3, %c0_4], %1 {strides = array<i32>} : memref<2x32x256xf32, #tpu.memory_space<vmem>>, vector<2x32x256xf32>,
    return
  }
  func.func @transform_0(%arg0: i32, %arg1: i32) -> (i32, i32, i32) {
    %c0_i32 = arith.constant 0 : i32
    %c0_i32_0 = arith.constant 0 : i32
    return %arg0, %arg1, %c0_i32 : i32, i32, i32
  }
  func.func @transform_1(%arg0: i32, %arg1: i32) -> (i32, i32, i32) {
    %c0_i32 = arith.constant 0 : i32
    %c0_i32_0 = arith.constant 0 : i32
    return %arg0, %c0_i32, %arg1 : i32, i32, i32
  }
}

</mosaic_0001>

<llo_original>
// kernel: tpu_custom_call.1
$region0: #{tpu_custom_call.1}
  #allocation0 [shape = 'u32[]', space=smem, size = 0x4, offset = 0x4, fixed_abs, tag = 'smem constant byte address 0x4 - core index']
  #allocation1 [shape = 'u32[144,128]{1,0:T(1,128)}', space=vmem, size = 0x12000, scoped, tag = 'internal scratch']
  %s0 = inlined_call_operand.vmem [shape: f32[2,256,32], index: 0, kind: input, shape index: {}]
  %s1 = inlined_call_operand.hbm [shape: f32[2,32,256], index: 1, kind: output, shape index: {}]
  %s2 = sld [smem:[#allocation0]]
  $region14: #{tpu_custom_call.1} parent=0
    _
  %s4 = ssub.s32 1, %s2
  %s5 = scalar_select 0, %s4, %s2
  $region1: #{tpu_custom_call.1} parent=0
    #allocation2 [shape = 'u8[65536]{0}', space=vmem, size = 0x10000, scoped, tag = 'output window, operand 0, single buffered']
    #allocation3 [shape = 's32[1]{0}', space=sflag, size = 0x4, scoped, tag = 'scoped memory for tpu_custom_call.1']
    %6 = vsyncpa [#allocation3], 0
    // Predicated region
    $region2: #{tpu_custom_call.1} parent=1 // pred_check
      _
    $region3: #{tpu_custom_call.1} parent=1 // pred_check_branch
      %8 = sbr.rel (0) target = $region5
    $region4: #{tpu_custom_call.1} parent=1 // pred_region
      _
    $region5: #{tpu_custom_call.1} parent=1 // pred_fallthru
      _
    %v9 = vld [vmem:[%s0] sm:$0xff]
    %v10 = vld [vmem:[%s0 + $0x8] sm:$0xff]
    %v11 = vld [vmem:[%s0 + $0x10] sm:$0xff]
    %v12 = vld [vmem:[%s0 + $0x18] sm:$0xff]
    %v13 = vld [vmem:[%s0 + $0x20] sm:$0xff]
    %v14 = vld [vmem:[%s0 + $0x28] sm:$0xff]
    %v15 = vld [vmem:[%s0 + $0x30] sm:$0xff]
    %v16 = vld [vmem:[%s0 + $0x38] sm:$0xff]
    %v17 = vld [vmem:[%s0 + $0x40] sm:$0xff]
    %v18 = vld [vmem:[%s0 + $0x48] sm:$0xff]
    %v19 = vld [vmem:[%s0 + $0x50] sm:$0xff]
    %v20 = vld [vmem:[%s0 + $0x58] sm:$0xff]
    %v21 = vld [vmem:[%s0 + $0x60] sm:$0xff]
    %v22 = vld [vmem:[%s0 + $0x68] sm:$0xff]
    %v23 = vld [vmem:[%s0 + $0x70] sm:$0xff]
    %v24 = vld [vmem:[%s0 + $0x78] sm:$0xff]
    %v25 = vld [vmem:[%s0 + $0x80] sm:$0xff]
    %v26 = vld [vmem:[%s0 + $0x88] sm:$0xff]
    %v27 = vld [vmem:[%s0 + $0x90] sm:$0xff]
    %v28 = vld [vmem:[%s0 + $0x98] sm:$0xff]
    %v29 = vld [vmem:[%s0 + $0xa0] sm:$0xff]
    %v30 = vld [vmem:[%s0 + $0xa8] sm:$0xff]
    %v31 = vld [vmem:[%s0 + $0xb0] sm:$0xff]
    %v32 = vld [vmem:[%s0 + $0xb8] sm:$0xff]
    %v33 = vld [vmem:[%s0 + $0xc0] sm:$0xff]
    %v34 = vld [vmem:[%s0 + $0xc8] sm:$0xff]
    %v35 = vld [vmem:[%s0 + $0xd0] sm:$0xff]
    %v36 = vld [vmem:[%s0 + $0xd8] sm:$0xff]
    %v37 = vld [vmem:[%s0 + $0xe0] sm:$0xff]
    %v38 = vld [vmem:[%s0 + $0xe8] sm:$0xff]
    %v39 = vld [vmem:[%s0 + $0xf0] sm:$0xff]
    %v40 = vld [vmem:[%s0 + $0xf8] sm:$0xff]
    %v41 = vld [vmem:[%s0 + $0x100] sm:$0xff]
    %v42 = vld [vmem:[%s0 + $0x108] sm:$0xff]
    %v43 = vld [vmem:[%s0 + $0x110] sm:$0xff]
    %v44 = vld [vmem:[%s0 + $0x118] sm:$0xff]
    %v45 = vld [vmem:[%s0 + $0x120] sm:$0xff]
    %v46 = vld [vmem:[%s0 + $0x128] sm:$0xff]
    %v47 = vld [vmem:[%s0 + $0x130] sm:$0xff]
    %v48 = vld [vmem:[%s0 + $0x138] sm:$0xff]
    %v49 = vld [vmem:[%s0 + $0x140] sm:$0xff]
    %v50 = vld [vmem:[%s0 + $0x148] sm:$0xff]
    %v51 = vld [vmem:[%s0 + $0x150] sm:$0xff]
    %v52 = vld [vmem:[%s0 + $0x158] sm:$0xff]
    %v53 = vld [vmem:[%s0 + $0x160] sm:$0xff]
    %v54 = vld [vmem:[%s0 + $0x168] sm:$0xff]
    %v55 = vld [vmem:[%s0 + $0x170] sm:$0xff]
    %v56 = vld [vmem:[%s0 + $0x178] sm:$0xff]
    %v57 = vld [vmem:[%s0 + $0x180] sm:$0xff]
    %v58 = vld [vmem:[%s0 + $0x188] sm:$0xff]
    %v59 = vld [vmem:[%s0 + $0x190] sm:$0xff]
    %v60 = vld [vmem:[%s0 + $0x198] sm:$0xff]
    %v61 = vld [vmem:[%s0 + $0x1a0] sm:$0xff]
    %v62 = vld [vmem:[%s0 + $0x1a8] sm:$0xff]
    %v63 = vld [vmem:[%s0 + $0x1b0] sm:$0xff]
    %v64 = vld [vmem:[%s0 + $0x1b8] sm:$0xff]
    %v65 = vld [vmem:[%s0 + $0x1c0] sm:$0xff]
    %v66 = vld [vmem:[%s0 + $0x1c8] sm:$0xff]
    %v67 = vld [vmem:[%s0 + $0x1d0] sm:$0xff]
    %v68 = vld [vmem:[%s0 + $0x1d8] sm:$0xff]
    %v69 = vld [vmem:[%s0 + $0x1e0] sm:$0xff]
    %v70 = vld [vmem:[%s0 + $0x1e8] sm:$0xff]
    %v71 = vld [vmem:[%s0 + $0x1f0] sm:$0xff]
    %v72 = vld [vmem:[%s0 + $0x1f8] sm:$0xff]
    %73 = vxpose.xlu0.b32.start [1/16] %v9, 128
    %74 = vxpose.xlu0.b32.cont [2/16] %v10, 128
    %75 = vxpose.xlu0.b32.cont [3/16] %v11, 128
    %76 = vxpose.xlu0.b32.cont [4/16] %v12, 128
    %77 = vxpose.xlu0.b32.cont [5/16] %v13, 128
    %78 = vxpose.xlu0.b32.cont [6/16] %v14, 128
    %79 = vxpose.xlu0.b32.cont [7/16] %v15, 128
    %80 = vxpose.xlu0.b32.cont [8/16] %v16, 128
    %81 = vxpose.xlu0.b32.cont [9/16] %v17, 128
    %82 = vxpose.xlu0.b32.cont [10/16] %v18, 128
    %83 = vxpose.xlu0.b32.cont [11/16] %v19, 128
    %84 = vxpose.xlu0.b32.cont [12/16] %v20, 128
    %85 = vxpose.xlu0.b32.cont [13/16] %v21, 128
    %86 = vxpose.xlu0.b32.cont [14/16] %v22, 128
    %87 = vxpose.xlu0.b32.cont [15/16] %v23, 128
    %88 = vxpose.xlu0.b32.end [16/16] %v24, 128
    %v89 = vpop.trf.xlu0
    %v90 = vpop.trf.xlu0
    %v91 = vpop.trf.xlu0
    %v92 = vpop.trf.xlu0
    %v93 = vpop.trf.xlu0
    %v94 = vpop.trf.xlu0
    %v95 = vpop.trf.xlu0
    %v96 = vpop.trf.xlu0
    %v97 = vpop.trf.xlu0
    %v98 = vpop.trf.xlu0
    %v99 = vpop.trf.xlu0
    %v100 = vpop.trf.xlu0
    %v101 = vpop.trf.xlu0
    %v102 = vpop.trf.xlu0
    %v103 = vpop.trf.xlu0
    %v104 = vpop.trf.xlu0
    %105 = vxpose.xlu0.b32.start [1/16] %v25, 128
    %106 = vxpose.xlu0.b32.cont [2/16] %v26, 128
    %107 = vxpose.xlu0.b32.cont [3/16] %v27, 128
    %108 = vxpose.xlu0.b32.cont [4/16] %v28, 128
    %109 = vxpose.xlu0.b32.cont [5/16] %v29, 128
    %110 = vxpose.xlu0.b32.cont [6/16] %v30, 128
    %111 = vxpose.xlu0.b32.cont [7/16] %v31, 128
    %112 = vxpose.xlu0.b32.cont [8/16] %v32, 128
    %113 = vxpose.xlu0.b32.cont [9/16] %v33, 128
    %114 = vxpose.xlu0.b32.cont [10/16] %v34, 128
    %115 = vxpose.xlu0.b32.cont [11/16] %v35, 128
    %116 = vxpose.xlu0.b32.cont [12/16] %v36, 128
    %117 = vxpose.xlu0.b32.cont [13/16] %v37, 128
    %118 = vxpose.xlu0.b32.cont [14/16] %v38, 128
    %119 = vxpose.xlu0.b32.cont [15/16] %v39, 128
    %120 = vxpose.xlu0.b32.end [16/16] %v40, 128
    %v121 = vpop.trf.xlu0
    %v122 = vpop.trf.xlu0
    %v123 = vpop.trf.xlu0
    %v124 = vpop.trf.xlu0
    %v125 = vpop.trf.xlu0
    %v126 = vpop.trf.xlu0
    %v127 = vpop.trf.xlu0
    %v128 = vpop.trf.xlu0
    %v129 = vpop.trf.xlu0
    %v130 = vpop.trf.xlu0
    %v131 = vpop.trf.xlu0
    %v132 = vpop.trf.xlu0
    %v133 = vpop.trf.xlu0
    %v134 = vpop.trf.xlu0
    %v135 = vpop.trf.xlu0
    %v136 = vpop.trf.xlu0
    %137 = vxpose.xlu0.b32.start [1/16] %v41, 128
    %138 = vxpose.xlu0.b32.cont [2/16] %v42, 128
    %139 = vxpose.xlu0.b32.cont [3/16] %v43, 128
    %140 = vxpose.xlu0.b32.cont [4/16] %v44, 128
    %141 = vxpose.xlu0.b32.cont [5/16] %v45, 128
    %142 = vxpose.xlu0.b32.cont [6/16] %v46, 128
    %143 = vxpose.xlu0.b32.cont [7/16] %v47, 128
    %144 = vxpose.xlu0.b32.cont [8/16] %v48, 128
    %145 = vxpose.xlu0.b32.cont [9/16] %v49, 128
    %146 = vxpose.xlu0.b32.cont [10/16] %v50, 128
    %147 = vxpose.xlu0.b32.cont [11/16] %v51, 128
    %148 = vxpose.xlu0.b32.cont [12/16] %v52, 128
    %149 = vxpose.xlu0.b32.cont [13/16] %v53, 128
    %150 = vxpose.xlu0.b32.cont [14/16] %v54, 128
    %151 = vxpose.xlu0.b32.cont [15/16] %v55, 128
    %152 = vxpose.xlu0.b32.end [16/16] %v56, 128
    %v153 = vpop.trf.xlu0
    %v154 = vpop.trf.xlu0
    %v155 = vpop.trf.xlu0
    %v156 = vpop.trf.xlu0
    %v157 = vpop.trf.xlu0
    %v158 = vpop.trf.xlu0
    %v159 = vpop.trf.xlu0
    %v160 = vpop.trf.xlu0
    %v161 = vpop.trf.xlu0
    %v162 = vpop.trf.xlu0
    %v163 = vpop.trf.xlu0
    %v164 = vpop.trf.xlu0
    %v165 = vpop.trf.xlu0
    %v166 = vpop.trf.xlu0
    %v167 = vpop.trf.xlu0
    %v168 = vpop.trf.xlu0
    %169 = vxpose.xlu0.b32.start [1/16] %v57, 128
    %170 = vxpose.xlu0.b32.cont [2/16] %v58, 128
    %171 = vxpose.xlu0.b32.cont [3/16] %v59, 128
    %172 = vxpose.xlu0.b32.cont [4/16] %v60, 128
    %173 = vxpose.xlu0.b32.cont [5/16] %v61, 128
    %174 = vxpose.xlu0.b32.cont [6/16] %v62, 128
    %175 = vxpose.xlu0.b32.cont [7/16] %v63, 128
    %176 = vxpose.xlu0.b32.cont [8/16] %v64, 128
    %177 = vxpose.xlu0.b32.cont [9/16] %v65, 128
    %178 = vxpose.xlu0.b32.cont [10/16] %v66, 128
    %179 = vxpose.xlu0.b32.cont [11/16] %v67, 128
    %180 = vxpose.xlu0.b32.cont [12/16] %v68, 128
    %181 = vxpose.xlu0.b32.cont [13/16] %v69, 128
    %182 = vxpose.xlu0.b32.cont [14/16] %v70, 128
    %183 = vxpose.xlu0.b32.cont [15/16] %v71, 128
    %184 = vxpose.xlu0.b32.end [16/16] %v72, 128
    %v185 = vpop.trf.xlu0
    %v186 = vpop.trf.xlu0
    %v187 = vpop.trf.xlu0
    %v188 = vpop.trf.xlu0
    %v189 = vpop.trf.xlu0
    %v190 = vpop.trf.xlu0
    %v191 = vpop.trf.xlu0
    %v192 = vpop.trf.xlu0
    %v193 = vpop.trf.xlu0
    %v194 = vpop.trf.xlu0
    %v195 = vpop.trf.xlu0
    %v196 = vpop.trf.xlu0
    %v197 = vpop.trf.xlu0
    %v198 = vpop.trf.xlu0
    %v199 = vpop.trf.xlu0
    %v200 = vpop.trf.xlu0
    %201 = vst [vmem:[#allocation2] sm:$0xff] %v89
    %202 = vst [vmem:[#allocation2 + $0x8] sm:$0xff] %v121
    %203 = vst [vmem:[#allocation2 + $0x10] sm:$0xff] %v90
    %204 = vst [vmem:[#allocation2 + $0x18] sm:$0xff] %v122
    %205 = vst [vmem:[#allocation2 + $0x20] sm:$0xff] %v91
    %206 = vst [vmem:[#allocation2 + $0x28] sm:$0xff] %v123
    %207 = vst [vmem:[#allocation2 + $0x30] sm:$0xff] %v92
    %208 = vst [vmem:[#allocation2 + $0x38] sm:$0xff] %v124
    %209 = vst [vmem:[#allocation2 + $0x40] sm:$0xff] %v153
    %210 = vst [vmem:[#allocation2 + $0x48] sm:$0xff] %v185
    %211 = vst [vmem:[#allocation2 + $0x50] sm:$0xff] %v154
    %212 = vst [vmem:[#allocation2 + $0x58] sm:$0xff] %v186
    %213 = vst [vmem:[#allocation2 + $0x60] sm:$0xff] %v155
    %214 = vst [vmem:[#allocation2 + $0x68] sm:$0xff] %v187
    %215 = vst [vmem:[#allocation2 + $0x70] sm:$0xff] %v156
    %216 = vst [vmem:[#allocation2 + $0x78] sm:$0xff] %v188
    // Predicated region
    $region6: #{tpu_custom_call.1} parent=1 // pred_check
      _
    $region7: #{tpu_custom_call.1} parent=1 // pred_check_branch
      %218 = sbr.rel (0) target = $region9
    $region8: #{tpu_custom_call.1} parent=1 // pred_region
      %s220 = ssub.s32 2048, 2048
      %221 = vsyncadd [#allocation3], %s220
      %s222 = sshll.u32 [#allocation2], 4
      %s223 = int_to_ptr.vmem [resolvable:$true] %s222
      %228 = dma.vmem_to_hbm [thread:$0]  %s223, 2048, %s1, [#allocation3], 256, 256, 16
    $region9: #{tpu_custom_call.1} parent=1 // pred_fallthru
      _
    // Predicated region
    $region10: #{tpu_custom_call.1} parent=1 // pred_check
      _
    $region11: #{tpu_custom_call.1} parent=1 // pred_check_branch
      %230 = sbr.rel (0) target = $region13
    $region12: #{tpu_custom_call.1} parent=1 // pred_region
      %231 = dma.done [#allocation3], 2048
    $region13: #{tpu_custom_call.1} parent=1 // pred_fallthru
      _
    %232 = vsyncpa [#allocation3], 1

</llo_original>
